<compile_context>
chip_gen: v7x
topology: tpu7x:2x2x1
jax: 0.10.0
libtpu: 0.0.40
codegen_flags: <defaults>
</compile_context>

<pallas_src>
import jax
import jax.numpy as jnp
from jax.experimental import pallas as pl
from jax.experimental.pallas import tpu as pltpu

_MIB = 1024 * 1024


def _hswish_kernel(x_ref, o_ref):
    # Compute in f32 (free on a bandwidth-bound op) and divide by 6 so results
    # match the reference x * relu6(x + 3) / 6 to the ulp for f32 inputs.
    x = x_ref[...].astype(jnp.float32)
    r6 = jnp.clip(x + 3.0, 0.0, 6.0)
    o_ref[...] = (x * r6 / 6.0).astype(o_ref.dtype)


def _vmem_config():
    """Generation-aware (target block bytes per buffer, vmem_limit_bytes)."""
    try:
        info = pltpu.get_tpu_info()
        vmem_cap = getattr(info, "vmem_capacity_bytes", 64 * _MIB)
    except Exception:
        vmem_cap = 64 * _MIB  # unknown: be conservative (v7x-sized)
    if vmem_cap >= 100 * _MIB:          # v5e / v6e: 128 MiB physical VMEM
        return 8 * _MIB, 64 * _MIB      # 2 arrays x 2 bufs x 8 MiB = 32 MiB
    return 4 * _MIB, 32 * _MIB          # v7x: 64 MiB physical VMEM per TC


def _cost(n_elems, itemsize):
    # ~5 flops/elem (add, clamp lo/hi, 2 muls), no transcendentals, 1R + 1W.
    return pl.CostEstimate(flops=5 * n_elems, transcendentals=0,
                           bytes_accessed=2 * n_elems * itemsize)


def _compiler_params(vmem_limit):
    return pltpu.CompilerParams(
        dimension_semantics=("parallel",),
        vmem_limit_bytes=vmem_limit,
    )


def hswish(x: jax.Array, *, donate_input: bool = False,
           block_bytes: int | None = None) -> jax.Array:
    """Elementwise hard-swish: x * relu6(x + 3) / 6 (exact module semantics)."""
    orig_shape = x.shape
    dtype = x.dtype
    n = x.size
    if n == 0:
        return x

    itemsize = jnp.dtype(dtype).itemsize
    target_bytes, vmem_limit = _vmem_config()
    if block_bytes is not None:        # test / tuning hook
        target_bytes = block_bytes
    total_bytes = n * itemsize
    aliases = {0: 0} if donate_input else {}

    # ---- aligned path: lane-dense 2-D view, no pad / no extra copies -------
    lanes = next((c for c in (1024, 512, 256, 128) if n % c == 0), None)
    if lanes is not None:
        rows = n // lanes
        sub = max(8, 32 // itemsize)   # sublane multiple per dtype packing
        block_rows = max(sub, target_bytes // (lanes * itemsize))
        if total_bytes > 2 * _MIB:     # keep >= 2 blocks so v7x megacore splits
            block_rows = min(block_rows, pl.cdiv(rows, 2))
        block_rows = min(block_rows, rows)
        if block_rows < rows:          # keep (sub, 128) tiling legal
            block_rows = max(sub, (block_rows // sub) * sub)

        grid = (pl.cdiv(rows, block_rows),)
        out2d = pl.pallas_call(
            _hswish_kernel,
            out_shape=jax.ShapeDtypeStruct((rows, lanes), dtype),
            grid=grid,
            in_specs=[pl.BlockSpec((block_rows, lanes), lambda i: (i, 0))],
            out_specs=pl.BlockSpec((block_rows, lanes), lambda i: (i, 0)),
            compiler_params=_compiler_params(vmem_limit),
            cost_estimate=_cost(n, itemsize),
            input_output_aliases=aliases,
        )(x.reshape(rows, lanes))
        return out2d.reshape(orig_shape)

    # ---- ragged path: 1-D blocks, Pallas masks the partial final block -----
    # Safe only because the op is purely elementwise (garbage in the masked
    # tail never feeds a reduction and out-of-bounds writes are dropped).
    unit = 8 * 128 * max(1, 4 // itemsize)           # legal for all packings
    block_len = max(unit, (target_bytes // itemsize) // unit * unit)
    if total_bytes > 2 * _MIB:
        half = pl.cdiv(pl.cdiv(n, 2), unit) * unit
        block_len = min(block_len, half)
    if block_len >= n:
        block_len = n                                  # single full-extent block
    grid = (pl.cdiv(n, block_len),)
    out1d = pl.pallas_call(
        _hswish_kernel,
        out_shape=jax.ShapeDtypeStruct((n,), dtype),
        grid=grid,
        in_specs=[pl.BlockSpec((block_len,), lambda i: (i,))],
        out_specs=pl.BlockSpec((block_len,), lambda i: (i,)),
        compiler_params=_compiler_params(vmem_limit),
        cost_estimate=_cost(n, itemsize),
        input_output_aliases=aliases,
    )(x.reshape(n))
    return out1d.reshape(orig_shape)


def _hswish_ref(x):
    return x * jnp.clip(x + 3.0, 0.0, 6.0) / 6.0


if __name__ == "__main__":
    key = jax.random.PRNGKey(0)
    k0, k1, k2, k3 = jax.random.split(key, 4)

    # A: NCHW conv-style input (the module's typical use), aligned 2-D path.
    xa = jax.random.normal(k0, (2, 4, 16, 16), dtype=jnp.float32) * 4.0
    ya = hswish(xa)
    jax.block_until_ready(ya)
    assert ya.shape == xa.shape and ya.dtype == xa.dtype
    assert jnp.allclose(ya, _hswish_ref(xa), atol=1e-6, rtol=1e-6)

    # B: aligned path with a multi-block grid (small forced blocks).
    xb = jax.random.normal(k1, (8, 4, 32, 32), dtype=jnp.float32) * 4.0
    yb = hswish(xb, block_bytes=16 * 1024)
    jax.block_until_ready(yb)
    assert jnp.allclose(yb, _hswish_ref(xb), atol=1e-6, rtol=1e-6)

    # C: ragged size -> 1-D path with a masked partial final block.
    xc = jax.random.normal(k2, (3, 5, 7, 11), dtype=jnp.float32) * 4.0
    yc = hswish(xc, block_bytes=4 * 1024)
    jax.block_until_ready(yc)
    assert yc.shape == xc.shape and yc.dtype == xc.dtype
    assert jnp.allclose(yc, _hswish_ref(xc), atol=1e-6, rtol=1e-6)

    # D: ragged size -> 1-D path, single full-extent block (default config).
    xd = jax.random.normal(k3, (3, 5, 7), dtype=jnp.float32) * 4.0
    yd = hswish(xd)
    jax.block_until_ready(yd)
    assert jnp.allclose(yd, _hswish_ref(xd), atol=1e-6, rtol=1e-6)

    print("KERNEL_OK")
</pallas_src>

<mosaic_0001>
module attributes {stable_mosaic.version = 11 : i64} {
  func.func @_hswish_kernel(%arg0: i32, %arg1: memref<2x1024xf32, #tpu.memory_space<vmem>>, %arg2: memref<2x1024xf32, #tpu.memory_space<vmem>>) attributes {dimension_semantics = [#tpu.dimension_semantics<parallel>], iteration_bounds = array<i64: 1>, scalar_prefetch = 0 : i64, scratch_operands = 0 : i64, tpu.core_type = #tpu.core_type<tc>, window_params = [{transform_indices = @transform_0, window_bounds = array<i64: 2, 1024>}, {transform_indices = @transform_1, window_bounds = array<i64: 2, 1024>}]} {
    %c0 = arith.constant 0 : index
    %c0_0 = arith.constant 0 : index
    %0 = vector.load %arg1[%c0, %c0_0] : memref<2x1024xf32, #tpu.memory_space<vmem>>, vector<2x1024xf32>
    %cst = arith.constant 3.000000e+00 : f32
    %1 = vector.broadcast %cst : f32 to vector<2x1024xf32>
    %2 = arith.addf %0, %1 : vector<2x1024xf32>
    %cst_1 = arith.constant 0.000000e+00 : f32
    %cst_2 = arith.constant 6.000000e+00 : f32
    %3 = vector.broadcast %cst_1 : f32 to vector<2x1024xf32>
    %4 = arith.maximumf %3, %2 : vector<2x1024xf32>
    %5 = vector.broadcast %cst_2 : f32 to vector<2x1024xf32>
    %6 = arith.minimumf %5, %4 : vector<2x1024xf32>
    %7 = arith.mulf %0, %6 : vector<2x1024xf32>
    %cst_3 = arith.constant 6.000000e+00 : f32
    %8 = vector.broadcast %cst_3 : f32 to vector<2x1024xf32>
    %9 = arith.divf %7, %8 : vector<2x1024xf32>
    %c0_4 = arith.constant 0 : index
    %c0_5 = arith.constant 0 : index
    %10 = vector.load %arg2[%c0_4, %c0_5] : memref<2x1024xf32, #tpu.memory_space<vmem>>, vector<2x1024xf32>
    tpu.vector_store %arg2[%c0_4, %c0_5], %9 {strides = array<i32>} : memref<2x1024xf32, #tpu.memory_space<vmem>>, vector<2x1024xf32>,
    return
  }
  func.func @transform_0(%arg0: i32) -> (i32, i32) {
    %c0_i32 = arith.constant 0 : i32
    %c0_i32_0 = arith.constant 0 : i32
    return %arg0, %c0_i32 : i32, i32
  }
  func.func @transform_1(%arg0: i32) -> (i32, i32) {
    %c0_i32 = arith.constant 0 : i32
    %c0_i32_0 = arith.constant 0 : i32
    return %arg0, %c0_i32 : i32, i32
  }
}

</mosaic_0001>

<llo_original>
// kernel: tpu_custom_call.1
$region0: #{tpu_custom_call.1}
  #allocation0 [shape = 'u32[]', space=smem, size = 0x4, offset = 0x4, fixed_abs, tag = 'smem constant byte address 0x4 - core index']
  #allocation1 [shape = 'u32[144,128]{1,0:T(1,128)}', space=vmem, size = 0x12000, scoped, tag = 'internal scratch']
  %s0 = inlined_call_operand.hbm [shape: f32[2,1024], index: 0, kind: input, shape index: {}]
  %s1 = inlined_call_operand.hbm [shape: f32[2,1024], index: 1, kind: output, shape index: {}]
  %s2 = sld [smem:[#allocation0]]
  $region18: #{tpu_custom_call.1} parent=0
    _
  %s4 = ssub.s32 1, %s2
  %s5 = scalar_select 0, %s4, %s2
  $region1: #{tpu_custom_call.1} parent=0
    #allocation2 [shape = 'u8[8192]{0}', space=vmem, size = 0x2000, scoped, tag = 'input window, operand 0, single buffered']
    #allocation3 [shape = 's32[1]{0}', space=sflag, size = 0x4, scoped, tag = 'scoped memory for tpu_custom_call.1']
    #allocation4 [shape = 's32[1]{0}', space=sflag, size = 0x4, scoped, tag = 'scoped memory for tpu_custom_call.1']
    #allocation5 [shape = 'u8[8192]{0}', space=vmem, size = 0x2000, scoped, tag = 'output window, operand 0, single buffered']
    %6 = vsyncpa [#allocation3], 0
    %7 = vsyncpa [#allocation4], 0
    // Predicated region
    $region2: #{tpu_custom_call.1} parent=1 // pred_check
      _
    $region3: #{tpu_custom_call.1} parent=1 // pred_check_branch
      %9 = sbr.rel (0) target = $region5
    $region4: #{tpu_custom_call.1} parent=1 // pred_region
      %s11 = ssub.s32 256, 256
      %12 = vsyncadd [#allocation3], %s11
      %s14 = sshll.u32 [#allocation2], 4
      %s15 = int_to_ptr.vmem [resolvable:$true] %s14
      %17 = dma.hbm_to_vmem [thread:$0]  %s0, 256, %s15, [#allocation3]
    $region5: #{tpu_custom_call.1} parent=1 // pred_fallthru
      _
    // Predicated region
    $region6: #{tpu_custom_call.1} parent=1 // pred_check
      _
    $region7: #{tpu_custom_call.1} parent=1 // pred_check_branch
      %19 = sbr.rel (0) target = $region9
    $region8: #{tpu_custom_call.1} parent=1 // pred_region
      %20 = dma.done [#allocation3], 256
    $region9: #{tpu_custom_call.1} parent=1 // pred_fallthru
      _
    %v21 = vld [vmem:[#allocation2] sm:$0xff]
    %v22 = vld [vmem:[#allocation2 + $0x8] sm:$0xff]
    %v23 = vadd.f32 %v21, 3.0
    %v24 = vadd.f32 %v22, 3.0
    %v25 = vmax.f32 %v23, 0.0
    %v26 = vmax.f32 %v24, 0.0
    %v27 = vmin.f32 %v25, 6.0
    %v28 = vmin.f32 %v26, 6.0
    %v29 = vmul.f32 %v21, %v27
    %v30 = vmul.f32 %v22, %v28
    %v31 = vrcp.pop 6.0
    %v32 = vmul.f32 %v29, %v31
    %v33 = vmul.f32 %v30, %v31
    %34 = vst [vmem:[#allocation5] sm:$0xff] %v32
    %35 = vst [vmem:[#allocation5 + $0x8] sm:$0xff] %v33
    // Predicated region
    $region10: #{tpu_custom_call.1} parent=1 // pred_check
      _
    $region11: #{tpu_custom_call.1} parent=1 // pred_check_branch
      %37 = sbr.rel (0) target = $region13
    $region12: #{tpu_custom_call.1} parent=1 // pred_region
      %s39 = ssub.s32 256, 256
      %40 = vsyncadd [#allocation4], %s39
      %s42 = sshll.u32 [#allocation5], 4
      %s43 = int_to_ptr.vmem [resolvable:$true] %s42
      %45 = dma.vmem_to_hbm [thread:$0]  %s43, 256, %s1, [#allocation4]
    $region13: #{tpu_custom_call.1} parent=1 // pred_fallthru
      _
    // Predicated region
    $region14: #{tpu_custom_call.1} parent=1 // pred_check
      _
    $region15: #{tpu_custom_call.1} parent=1 // pred_check_branch
      %47 = sbr.rel (0) target = $region17
    $region16: #{tpu_custom_call.1} parent=1 // pred_region
      %48 = dma.done [#allocation4], 256
    $region17: #{tpu_custom_call.1} parent=1 // pred_fallthru
      _
    %49 = vsyncpa [#allocation3], 1
    %50 = vsyncpa [#allocation4], 1

</llo_original>
